<compile_context>
chip_gen: v6e
topology: v6e:2x2x1
jax: 0.10.0
libtpu: 0.0.40
codegen_flags: <defaults>
</compile_context>

<pallas_src>
import functools

import jax
import jax.numpy as jnp
from jax.experimental import pallas as pl
from jax.experimental.pallas import tpu as pltpu


def intent_classifier_kernel(x_ref, w1_ref, b1_ref, w2_ref, b2_ref, o_ref,
                             *, matmul_dtype=None):
    # Hidden projection: (TB, D) @ (D, H_pad) -> (TB, H_pad), f32 accumulate.
    h = jnp.dot(x_ref[...], w1_ref[...], preferred_element_type=jnp.float32)
    h = jnp.tanh(h + b1_ref[...])        # bias add: VALU; tanh: EUP slot

    # Dropout: identity at inference time.

    if matmul_dtype is not None:
        h = h.astype(matmul_dtype)       # only h needs a cast; weights were
                                         # cast once in the wrapper.

    # Output projection: (TB, H_pad) @ (H_pad, N) -> (TB, N), f32 accumulate.
    out = jnp.dot(h, w2_ref[...], preferred_element_type=jnp.float32)
    out = out + b2_ref[...]
    o_ref[...] = out.astype(o_ref.dtype)


def _default_num_tiles(B):
    """v7x has 2 TensorCores per chip: give each one a 'parallel' grid step.

    On single-TensorCore chips (v5e/v6e) extra grid steps are pure overhead,
    so use one big tile.
    """
    try:
        kind = jax.devices()[0].device_kind.lower()
    except Exception:
        kind = ""
    if "v7" in kind and B >= 16:
        return 2
    return 1


def intent_classifier(x, w1, b1, w2, b2, *, batch_tile=4096, num_tiles=None,
                      matmul_dtype=None):
    """x: (B, D); w1: (D, 2D); b1: (2D,); w2: (2D, N); b2: (N,).

    matmul_dtype: None keeps f32 matmul inputs (exact path); jnp.bfloat16
    halves the x HBM stream and uses the native bf16 MXU on v6e/v7x (relax
    numerical tolerances accordingly).  Accumulation and the tanh/bias path
    stay f32 either way.
    """
    B, D = x.shape
    H = w1.shape[1]              # 2 * D
    N = w2.shape[1]              # num_intent_labels
    out_dtype = x.dtype

    # --- Pad the hidden dim to a full 128-lane vreg (bit-exact). ------------
    H_pad = max(128, pl.cdiv(H, 128) * 128)
    if H_pad != H:
        w1 = jnp.pad(w1, ((0, 0), (0, H_pad - H)))
        b1 = jnp.pad(b1, ((0, H_pad - H),))
        w2 = jnp.pad(w2, ((0, H_pad - H), (0, 0)))

    # Keep biases 2-D (and f32) so they broadcast cleanly inside the kernel.
    b1_2d = b1.reshape(1, H_pad).astype(jnp.float32)
    b2_2d = b2.reshape(1, N).astype(jnp.float32)

    # --- Optional bf16 streaming: cast once here, never inside the kernel. --
    if matmul_dtype is not None:
        x = x.astype(matmul_dtype)
        w1 = w1.astype(matmul_dtype)
        w2 = w2.astype(matmul_dtype)

    # --- Batch tiling: as few grid steps as possible. ------------------------
    if num_tiles is None:
        num_tiles = _default_num_tiles(B)
    num_tiles = max(num_tiles, pl.cdiv(B, batch_tile))   # cap tile size
    TB = max(8, pl.cdiv(pl.cdiv(B, num_tiles), 8) * 8)   # sublane-aligned
    n_tiles = pl.cdiv(B, TB)
    # No pre-padding of x and no output slicing: Pallas handles the ragged
    # final block, and rows past B are simply never written back.

    const_block = lambda shape: pl.BlockSpec(shape, lambda i: (0,) * len(shape))

    kernel = functools.partial(intent_classifier_kernel,
                               matmul_dtype=matmul_dtype)

    out = pl.pallas_call(
        kernel,
        out_shape=jax.ShapeDtypeStruct((B, N), out_dtype),
        grid_spec=pltpu.PrefetchScalarGridSpec(
            num_scalar_prefetch=0,
            grid=(n_tiles,),
            in_specs=[
                pl.BlockSpec((TB, D), lambda i: (i, 0)),   # streamed x tiles
                const_block((D, H_pad)),                   # resident weights
                const_block((1, H_pad)),
                const_block((H_pad, N)),
                const_block((1, N)),
            ],
            # N equals the full array dim, so this block is legal and the
            # writeback carries no lane padding.
            out_specs=pl.BlockSpec((TB, N), lambda i: (i, 0)),
        ),
        compiler_params=pltpu.CompilerParams(
            dimension_semantics=("parallel",),
        ),
    )(x, w1, b1_2d, w2, b2_2d)

    return out


def reference(x, w1, b1, w2, b2):
    h = jnp.tanh(x @ w1 + b1)
    return h @ w2 + b2


if __name__ == "__main__":
    key = jax.random.PRNGKey(0)
    B = 8                     # batch
    D = 32                    # input_dim
    H = 2 * D                 # hidden = input_dim * 2
    N = 16                    # num_intent_labels

    kx, k1, kb1, k2, kb2 = jax.random.split(key, 5)

    # Deterministic parameter init mimicking nn.Linear's U(-1/sqrt(fan_in), +)
    bound1 = 1.0 / (D ** 0.5)
    bound2 = 1.0 / (H ** 0.5)
    x = jax.random.normal(kx, (B, D), dtype=jnp.float32)
    w1 = jax.random.uniform(k1, (D, H), jnp.float32, -bound1, bound1)
    b1 = jax.random.uniform(kb1, (H,), jnp.float32, -bound1, bound1)
    w2 = jax.random.uniform(k2, (H, N), jnp.float32, -bound2, bound2)
    b2 = jax.random.uniform(kb2, (N,), jnp.float32, -bound2, bound2)

    out = intent_classifier(x, w1, b1, w2, b2)
    out = jax.block_until_ready(out)

    ref = reference(x, w1, b1, w2, b2)
    assert out.shape == (B, N), out.shape
    assert jnp.allclose(out, ref, atol=1e-5, rtol=1e-5), \
        float(jnp.max(jnp.abs(out - ref)))

    # Exercise the ragged-final-block path with a realistic serving batch too
    # (B=1030 is not a multiple of 8, so the single tile overruns by 2 rows).
    B2 = 1030
    x2 = jax.random.normal(jax.random.PRNGKey(1), (B2, D), dtype=jnp.float32)
    out2 = jax.block_until_ready(intent_classifier(x2, w1, b1, w2, b2))
    ref2 = reference(x2, w1, b1, w2, b2)
    assert out2.shape == (B2, N), out2.shape
    assert jnp.allclose(out2, ref2, atol=1e-5, rtol=1e-5), \
        float(jnp.max(jnp.abs(out2 - ref2)))

    # Explicit two-tile path (what v7x would pick automatically).
    out3 = jax.block_until_ready(
        intent_classifier(x2, w1, b1, w2, b2, num_tiles=2))
    assert jnp.allclose(out3, ref2, atol=1e-5, rtol=1e-5), \
        float(jnp.max(jnp.abs(out3 - ref2)))

    print("KERNEL_OK")
</pallas_src>

<mosaic_0001>
module attributes {stable_mosaic.version = 11 : i64} {
  func.func @intent_classifier_kernel(%arg0: i32, %arg1: memref<8x32xf32, #tpu.memory_space<vmem>>, %arg2: memref<32x128xf32, #tpu.memory_space<vmem>>, %arg3: memref<1x128xf32, #tpu.memory_space<vmem>>, %arg4: memref<128x16xf32, #tpu.memory_space<vmem>>, %arg5: memref<1x16xf32, #tpu.memory_space<vmem>>, %arg6: memref<8x16xf32, #tpu.memory_space<vmem>>) attributes {dimension_semantics = [#tpu.dimension_semantics<parallel>], iteration_bounds = array<i64: 1>, scalar_prefetch = 0 : i64, scratch_operands = 0 : i64, tpu.core_type = #tpu.core_type<tc>, window_params = [{transform_indices = @transform_0, window_bounds = array<i64: 8, 32>}, {pipeline_mode = #tpu.pipeline_mode<synchronous>, transform_indices = @transform_1, window_bounds = array<i64: 32, 128>}, {pipeline_mode = #tpu.pipeline_mode<synchronous>, transform_indices = @transform_2, window_bounds = array<i64: 1, 128>}, {pipeline_mode = #tpu.pipeline_mode<synchronous>, transform_indices = @transform_3, window_bounds = array<i64: 128, 16>}, {pipeline_mode = #tpu.pipeline_mode<synchronous>, transform_indices = @transform_4, window_bounds = array<i64: 1, 16>}, {transform_indices = @transform_5, window_bounds = array<i64: 8, 16>}]} {
    %c0 = arith.constant 0 : index
    %c0_0 = arith.constant 0 : index
    %0 = vector.load %arg1[%c0, %c0_0] : memref<8x32xf32, #tpu.memory_space<vmem>>, vector<8x32xf32>
    %c0_1 = arith.constant 0 : index
    %c0_2 = arith.constant 0 : index
    %1 = vector.load %arg2[%c0_1, %c0_2] : memref<32x128xf32, #tpu.memory_space<vmem>>, vector<32x128xf32>
    %cst = arith.constant dense<0.000000e+00> : vector<8x128xf32>
    %2 = tpu.matmul %0, %1, %cst {dimension_numbers = #tpu.dot_dimension_numbers<[1], [0], [0], [1], [0, 0, 1, 1], [], []>} : vector<8x32xf32>, vector<32x128xf32>, vector<8x128xf32> -> vector<8x128xf32>
    %c0_3 = arith.constant 0 : index
    %c0_4 = arith.constant 0 : index
    %3 = vector.load %arg3[%c0_3, %c0_4] : memref<1x128xf32, #tpu.memory_space<vmem>>, vector<1x128xf32>
    %4 = vector.broadcast %3 : vector<1x128xf32> to vector<8x128xf32>
    %5 = arith.addf %2, %4 : vector<8x128xf32>
    %6 = math.tanh %5 : vector<8x128xf32>
    %c0_5 = arith.constant 0 : index
    %c0_6 = arith.constant 0 : index
    %7 = vector.load %arg4[%c0_5, %c0_6] : memref<128x16xf32, #tpu.memory_space<vmem>>, vector<128x16xf32>
    %cst_7 = arith.constant dense<0.000000e+00> : vector<8x16xf32>
    %8 = tpu.matmul %6, %7, %cst_7 {dimension_numbers = #tpu.dot_dimension_numbers<[1], [0], [0], [1], [0, 0, 1, 1], [], []>} : vector<8x128xf32>, vector<128x16xf32>, vector<8x16xf32> -> vector<8x16xf32>
    %c0_8 = arith.constant 0 : index
    %c0_9 = arith.constant 0 : index
    %9 = vector.load %arg5[%c0_8, %c0_9] : memref<1x16xf32, #tpu.memory_space<vmem>>, vector<1x16xf32>
    %10 = vector.broadcast %9 : vector<1x16xf32> to vector<8x16xf32>
    %11 = arith.addf %8, %10 : vector<8x16xf32>
    %c0_10 = arith.constant 0 : index
    %c0_11 = arith.constant 0 : index
    %12 = vector.load %arg6[%c0_10, %c0_11] : memref<8x16xf32, #tpu.memory_space<vmem>>, vector<8x16xf32>
    tpu.vector_store %arg6[%c0_10, %c0_11], %11 {strides = array<i32>} : memref<8x16xf32, #tpu.memory_space<vmem>>, vector<8x16xf32>,
    return
  }
  func.func @transform_0(%arg0: i32) -> (i32, i32) {
    %c0_i32 = arith.constant 0 : i32
    %c0_i32_0 = arith.constant 0 : i32
    return %arg0, %c0_i32 : i32, i32
  }
  func.func @transform_1(%arg0: i32) -> (i32, i32) {
    %c0_i32 = arith.constant 0 : i32
    %c0_i32_0 = arith.constant 0 : i32
    %c0_i32_1 = arith.constant 0 : i32
    return %c0_i32, %c0_i32_0 : i32, i32
  }
  func.func @transform_2(%arg0: i32) -> (i32, i32) {
    %c0_i32 = arith.constant 0 : i32
    %c0_i32_0 = arith.constant 0 : i32
    %c0_i32_1 = arith.constant 0 : i32
    return %c0_i32, %c0_i32_0 : i32, i32
  }
  func.func @transform_3(%arg0: i32) -> (i32, i32) {
    %c0_i32 = arith.constant 0 : i32
    %c0_i32_0 = arith.constant 0 : i32
    %c0_i32_1 = arith.constant 0 : i32
    return %c0_i32, %c0_i32_0 : i32, i32
  }
  func.func @transform_4(%arg0: i32) -> (i32, i32) {
    %c0_i32 = arith.constant 0 : i32
    %c0_i32_0 = arith.constant 0 : i32
    %c0_i32_1 = arith.constant 0 : i32
    return %c0_i32, %c0_i32_0 : i32, i32
  }
  func.func @transform_5(%arg0: i32) -> (i32, i32) {
    %c0_i32 = arith.constant 0 : i32
    %c0_i32_0 = arith.constant 0 : i32
    return %arg0, %c0_i32 : i32, i32
  }
}

</mosaic_0001>

<llo_original>
// kernel: tpu_custom_call.1
$region0: #{tpu_custom_call.1}
  #allocation0 [shape = 'u32[]', space=smem, size = 0x4, offset = 0x4, fixed_abs, tag = 'smem constant byte address 0x4 - core index']
  #allocation1 [shape = 'u32[144,128]{1,0:T(1,128)}', space=vmem, size = 0x12000, scoped, tag = 'internal scratch']
  %s0 = inlined_call_operand.vmem [shape: f32[8,32], index: 0, kind: input, shape index: {}]
  %s1 = inlined_call_operand.vmem [shape: f32[32,128], index: 1, kind: input, shape index: {}]
  %s2 = inlined_call_operand.vmem [shape: f32[1,128], index: 2, kind: input, shape index: {}]
  %s3 = inlined_call_operand.vmem [shape: f32[128,16], index: 3, kind: input, shape index: {}]
  %s4 = inlined_call_operand.vmem [shape: f32[1,16], index: 4, kind: input, shape index: {}]
  %s5 = inlined_call_operand.hbm [shape: f32[8,16], index: 5, kind: output, shape index: {}]
  %s6 = sld [smem:[#allocation0]]
  $region30: #{tpu_custom_call.1} parent=0
    _
  %s8 = ssub.s32 1, %s6
  %s9 = scalar_select 0, %s8, %s6
  $region1: #{tpu_custom_call.1} parent=0
    #allocation2 [shape = 'u8[4096]{0}', space=vmem, size = 0x1000, scoped, tag = 'output window, operand 0, single buffered']
    #allocation3 [shape = 's32[1]{0}', space=sflag, size = 0x4, scoped, tag = 'scoped memory for tpu_custom_call.1']
    %10 = vsyncpa [#allocation3], 0
    // Predicated region
    $region2: #{tpu_custom_call.1} parent=1 // pred_check
      _
    $region3: #{tpu_custom_call.1} parent=1 // pred_check_branch
      %12 = sbr.rel (0) target = $region5
    $region4: #{tpu_custom_call.1} parent=1 // pred_region
      _
    $region5: #{tpu_custom_call.1} parent=1 // pred_fallthru
      _
    // Predicated region
    $region6: #{tpu_custom_call.1} parent=1 // pred_check
      _
    $region7: #{tpu_custom_call.1} parent=1 // pred_check_branch
      %14 = sbr.rel (0) target = $region9
    $region8: #{tpu_custom_call.1} parent=1 // pred_region
      _
    $region9: #{tpu_custom_call.1} parent=1 // pred_fallthru
      _
    // Predicated region
    $region10: #{tpu_custom_call.1} parent=1 // pred_check
      _
    $region11: #{tpu_custom_call.1} parent=1 // pred_check_branch
      %16 = sbr.rel (0) target = $region13
    $region12: #{tpu_custom_call.1} parent=1 // pred_region
      _
    $region13: #{tpu_custom_call.1} parent=1 // pred_fallthru
      _
    // Predicated region
    $region14: #{tpu_custom_call.1} parent=1 // pred_check
      _
    $region15: #{tpu_custom_call.1} parent=1 // pred_check_branch
      %18 = sbr.rel (0) target = $region17
    $region16: #{tpu_custom_call.1} parent=1 // pred_region
      _
    $region17: #{tpu_custom_call.1} parent=1 // pred_fallthru
      _
    // Predicated region
    $region18: #{tpu_custom_call.1} parent=1 // pred_check
      _
    $region19: #{tpu_custom_call.1} parent=1 // pred_check_branch
      %20 = sbr.rel (0) target = $region21
    $region20: #{tpu_custom_call.1} parent=1 // pred_region
      _
    $region21: #{tpu_custom_call.1} parent=1 // pred_fallthru
      _
    %v21 = vld [vmem:[%s0] sm:$0xff]
    %v22 = vld [vmem:[%s1] sm:$0xff]
    %v23 = vld [vmem:[%s1 + $0x8] sm:$0xff]
    %v24 = vld [vmem:[%s1 + $0x10] sm:$0xff]
    %v25 = vld [vmem:[%s1 + $0x18] sm:$0xff]
    %v26 = vld [vmem:[%s2] sm:$0x1]
    %v28 = vlaneseq
    %v29 = vshrl.u32 %v28, 7
    %v30 = vsub.s32 0, %v29
    %v31 = vrot.slane %v26, %v30
    %vm33 = vcmask 261120
    %v35 = vsel %vm33, %v21, 0
    %37 = vmatprep.subr.mxu0 0.0
    %38 = vmatpush1.msra.mxu0 0.0
    %39 = vmatprep.subr.mxu0 0.0
    %40 = vmatpush1.msra.mxu0 0.0
    %41 = vmatprep.subr.mxu0 0.0
    %42 = vmatpush1.msra.mxu0 0.0
    %43 = vmatprep.subr.mxu0 0.0
    %44 = vmatpush1.msra.mxu0 0.0
    %45 = vmatprep.subr.mxu0 0.0
    %46 = vmatpush1.msra.mxu0 0.0
    %47 = vmatprep.subr.mxu0 0.0
    %48 = vmatpush1.msra.mxu0 0.0
    %49 = vmatprep.subr.mxu0 0.0
    %50 = vmatpush1.msra.mxu0 0.0
    %51 = vmatprep.subr.mxu0 0.0
    %52 = vmatpush1.msra.mxu0 0.0
    %53 = vmatprep.subr.mxu0 0.0
    %54 = vmatpush1.msra.mxu0 0.0
    %55 = vmatprep.subr.mxu0 0.0
    %56 = vmatpush1.msra.mxu0 0.0
    %57 = vmatprep.subr.mxu0 0.0
    %58 = vmatpush1.msra.mxu0 0.0
    %59 = vmatprep.subr.mxu0 0.0
    %60 = vmatpush1.msra.mxu0 0.0
    %61 = vmatprep.subr.mxu0 0.0
    %62 = vmatpush1.msra.mxu0 %v25
    %63 = vmatprep.subr.mxu0 0.0
    %64 = vmatpush1.msra.mxu0 %v24
    %65 = vmatprep.subr.mxu0 0.0
    %66 = vmatpush1.msra.mxu0 %v23
    %67 = vmatprep.subr.mxu0 0.0
    %68 = vmatpush1.msra.mxu0 %v22
    %69 = vmatprep.subr.mxu0 0.0
    %70 = vmatpush2.msra.mxu0 0.0
    %71 = vmatprep.subr.mxu0 0.0
    %72 = vmatpush2.msra.mxu0 0.0
    %73 = vmatprep.subr.mxu0 0.0
    %74 = vmatpush2.msra.mxu0 0.0
    %75 = vmatprep.subr.mxu0 0.0
    %76 = vmatpush2.msra.mxu0 0.0
    %77 = vmatprep.subr.mxu0 0.0
    %78 = vmatpush2.msra.mxu0 0.0
    %79 = vmatprep.subr.mxu0 0.0
    %80 = vmatpush2.msra.mxu0 0.0
    %81 = vmatprep.subr.mxu0 0.0
    %82 = vmatpush2.msra.mxu0 0.0
    %83 = vmatprep.subr.mxu0 0.0
    %84 = vmatpush2.msra.mxu0 0.0
    %85 = vmatprep.subr.mxu0 0.0
    %86 = vmatpush2.msra.mxu0 0.0
    %87 = vmatprep.subr.mxu0 0.0
    %88 = vmatpush2.msra.mxu0 0.0
    %89 = vmatprep.subr.mxu0 0.0
    %90 = vmatpush2.msra.mxu0 0.0
    %91 = vmatprep.subr.mxu0 0.0
    %92 = vmatpush2.msra.mxu0 0.0
    %93 = vmatprep.subr.mxu0 0.0
    %94 = vmatpush2.msra.mxu0 0.0
    %95 = vmatprep.subr.mxu0 0.0
    %96 = vmatpush2.msra.mxu0 0.0
    %97 = vmatprep.subr.mxu0 0.0
    %98 = vmatpush2.msra.mxu0 0.0
    %99 = vmatprep.subr.mxu0 0.0
    %100 = vmatpush2.msra.mxu0 0.0
    %101 = vmatprep.mubr.f32.mxu0 0.0
    %102 = vmatmul.mubr.f32.gmra.mxu0 %v35
    %v103 = vpop.f32.mrf.mxu0
    %v104 = vadd.f32 %v31, %v103
    %v105 = vpop.f32.mrf.mxu0
    %106 = vdwg.mxu0
    %v107 = vtanh.pop %v104
    %v108 = vld [vmem:[%s3] sm:$0xff]
    %v109 = vld [vmem:[%s3 + $0x8] sm:$0xff]
    %v110 = vld [vmem:[%s3 + $0x10] sm:$0xff]
    %v111 = vld [vmem:[%s3 + $0x18] sm:$0xff]
    %v112 = vld [vmem:[%s3 + $0x20] sm:$0xff]
    %v113 = vld [vmem:[%s3 + $0x28] sm:$0xff]
    %v114 = vld [vmem:[%s3 + $0x30] sm:$0xff]
    %v115 = vld [vmem:[%s3 + $0x38] sm:$0xff]
    %v116 = vld [vmem:[%s3 + $0x40] sm:$0xff]
    %v117 = vld [vmem:[%s3 + $0x48] sm:$0xff]
    %v118 = vld [vmem:[%s3 + $0x50] sm:$0xff]
    %v119 = vld [vmem:[%s3 + $0x58] sm:$0xff]
    %v120 = vld [vmem:[%s3 + $0x60] sm:$0xff]
    %v121 = vld [vmem:[%s3 + $0x68] sm:$0xff]
    %v122 = vld [vmem:[%s3 + $0x70] sm:$0xff]
    %v123 = vld [vmem:[%s3 + $0x78] sm:$0xff]
    %v124 = vld [vmem:[%s4] sm:$0x1]
    %v126 = vlaneseq
    %v127 = vshrl.u32 %v126, 7
    %v128 = vsub.s32 0, %v127
    %v129 = vrot.slane %v124, %v128
    %131 = vmatprep.subr.mxu0 0.0
    %132 = vmatpush1.msra.mxu0 %v123
    %133 = vmatprep.subr.mxu0 0.0
    %134 = vmatpush1.msra.mxu0 %v122
    %135 = vmatprep.subr.mxu0 0.0
    %136 = vmatpush1.msra.mxu0 %v121
    %137 = vmatprep.subr.mxu0 0.0
    %138 = vmatpush1.msra.mxu0 %v120
    %139 = vmatprep.subr.mxu0 0.0
    %140 = vmatpush1.msra.mxu0 %v119
    %141 = vmatprep.subr.mxu0 0.0
    %142 = vmatpush1.msra.mxu0 %v118
    %143 = vmatprep.subr.mxu0 0.0
    %144 = vmatpush1.msra.mxu0 %v117
    %145 = vmatprep.subr.mxu0 0.0
    %146 = vmatpush1.msra.mxu0 %v116
    %147 = vmatprep.subr.mxu0 0.0
    %148 = vmatpush1.msra.mxu0 %v115
    %149 = vmatprep.subr.mxu0 0.0
    %150 = vmatpush1.msra.mxu0 %v114
    %151 = vmatprep.subr.mxu0 0.0
    %152 = vmatpush1.msra.mxu0 %v113
    %153 = vmatprep.subr.mxu0 0.0
    %154 = vmatpush1.msra.mxu0 %v112
    %155 = vmatprep.subr.mxu0 0.0
    %156 = vmatpush1.msra.mxu0 %v111
    %157 = vmatprep.subr.mxu0 0.0
    %158 = vmatpush1.msra.mxu0 %v110
    %159 = vmatprep.subr.mxu0 0.0
    %160 = vmatpush1.msra.mxu0 %v109
    %161 = vmatprep.subr.mxu0 0.0
    %162 = vmatpush1.msra.mxu0 %v108
    %163 = vmatprep.subr.mxu0 0.0
    %164 = vmatpush2.msra.mxu0 0.0
    %165 = vmatprep.subr.mxu0 0.0
    %166 = vmatpush2.msra.mxu0 0.0
    %167 = vmatprep.subr.mxu0 0.0
    %168 = vmatpush2.msra.mxu0 0.0
    %169 = vmatprep.subr.mxu0 0.0
    %170 = vmatpush2.msra.mxu0 0.0
    %171 = vmatprep.subr.mxu0 0.0
    %172 = vmatpush2.msra.mxu0 0.0
    %173 = vmatprep.subr.mxu0 0.0
    %174 = vmatpush2.msra.mxu0 0.0
    %175 = vmatprep.subr.mxu0 0.0
    %176 = vmatpush2.msra.mxu0 0.0
    %177 = vmatprep.subr.mxu0 0.0
    %178 = vmatpush2.msra.mxu0 0.0
    %179 = vmatprep.subr.mxu0 0.0
    %180 = vmatpush2.msra.mxu0 0.0
    %181 = vmatprep.subr.mxu0 0.0
    %182 = vmatpush2.msra.mxu0 0.0
    %183 = vmatprep.subr.mxu0 0.0
    %184 = vmatpush2.msra.mxu0 0.0
    %185 = vmatprep.subr.mxu0 0.0
    %186 = vmatpush2.msra.mxu0 0.0
    %187 = vmatprep.subr.mxu0 0.0
    %188 = vmatpush2.msra.mxu0 0.0
    %189 = vmatprep.subr.mxu0 0.0
    %190 = vmatpush2.msra.mxu0 0.0
    %191 = vmatprep.subr.mxu0 0.0
    %192 = vmatpush2.msra.mxu0 0.0
    %193 = vmatprep.subr.mxu0 0.0
    %194 = vmatpush2.msra.mxu0 0.0
    %195 = vmatprep.mubr.f32.mxu0 0.0
    %196 = vmatmul.mubr.f32.gmra.mxu0 %v107
    %v197 = vpop.f32.mrf.mxu0
    %v198 = vadd.f32 %v129, %v197
    %v199 = vpop.f32.mrf.mxu0
    %200 = vdwg.mxu0
    %vm201 = vcmask 130048
    %202 = vst.msk [vmem:[#allocation2] sm:$0xff] %vm201, %v198
    // Predicated region
    $region22: #{tpu_custom_call.1} parent=1 // pred_check
      _
    $region23: #{tpu_custom_call.1} parent=1 // pred_check_branch
      %204 = sbr.rel (0) target = $region25
    $region24: #{tpu_custom_call.1} parent=1 // pred_region
      %s206 = ssub.s32 128, 128
      %207 = vsyncadd [#allocation3], %s206
      %s209 = sshll.u32 [#allocation2], 4
      %s210 = int_to_ptr.vmem [resolvable:$true] %s209
      %212 = dma.vmem_to_hbm [thread:$0]  %s210, 128, %s5, [#allocation3]
    $region25: #{tpu_custom_call.1} parent=1 // pred_fallthru
      _
    // Predicated region
    $region26: #{tpu_custom_call.1} parent=1 // pred_check
      _
    $region27: #{tpu_custom_call.1} parent=1 // pred_check_branch
      %214 = sbr.rel (0) target = $region29
    $region28: #{tpu_custom_call.1} parent=1 // pred_region
      %215 = dma.done [#allocation3], 128
    $region29: #{tpu_custom_call.1} parent=1 // pred_fallthru
      _
    %216 = vsyncpa [#allocation3], 1

</llo_original>
